<compile_context>
chip_gen: v7x
topology: tpu7x:2x2x1
jax: 0.10.0
libtpu: 0.0.40
codegen_flags: <defaults>
</compile_context>

<pallas_src>
import functools

import jax
import jax.numpy as jnp
from jax import lax
from jax.experimental import pallas as pl
from jax.experimental.pallas import tpu as pltpu

_LANE = 128
_BLOCK_BUDGET_BYTES = 4 * 1024 * 1024     # per data block (f32), conservative
_VMEM_LIMIT_BYTES = 32 * 1024 * 1024      # >= v5e 16 MiB default, <= v7x 64 MiB
_MAX_BT = 8                               # batch rows per grid step (cap)
_MIN_STEPS = 8                            # target grid steps for DMA pipelining


def _round_up(a, b):
    return (a + b - 1) // b * b


def _mlp_attention(avg, mx, w1t, w2t):
    """sigmoid(fc2(relu(fc1(avg))) + fc2(relu(fc1(mx)))) for one batch tile.

    avg, mx: (bt, C); w1t: (C, Cr); w2t: (Cr, C)  ->  (bt, C).
    fc2 matmul is shared between the two branches.
    """
    h = (jnp.maximum(jnp.dot(avg, w1t, preferred_element_type=jnp.float32), 0.0)
         + jnp.maximum(jnp.dot(mx, w1t, preferred_element_type=jnp.float32), 0.0))
    y = jnp.dot(h, w2t, preferred_element_type=jnp.float32)
    return jax.nn.sigmoid(y)


def _ca_fused_kernel(x_ref, w1t_ref, w2t_ref, o_ref, *, hw, hw_pad):
    """Single pass: pooling + MLP + broadcast multiply for one batch tile."""
    s = jnp.sum(x_ref[...], axis=-1)                          # (bt, C); pad zeros ok
    if hw_pad > hw:                                           # mask padding for max
        col = lax.broadcasted_iota(jnp.int32, x_ref.shape, 2)
        xm = jnp.where(col < hw, x_ref[...], -jnp.inf)
    else:
        xm = x_ref[...]
    mx = jnp.max(xm, axis=-1)                                 # (bt, C)
    att = _mlp_attention(s * (1.0 / hw), mx, w1t_ref[...], w2t_ref[...])
    o_ref[...] = (x_ref[...] * att[:, :, None]).astype(o_ref.dtype)


def _ca_pool_kernel(x_ref, w1t_ref, w2t_ref, att_ref, sum_acc, max_acc,
                    *, hw, hwt, hw_pad):
    """Pass 1 (large maps): accumulate sum/max over HW tiles, emit attention."""
    j = pl.program_id(1)

    @pl.when(j == 0)
    def _():
        sum_acc[...] = jnp.zeros(sum_acc.shape, sum_acc.dtype)
        max_acc[...] = jnp.full(max_acc.shape, -jnp.inf, max_acc.dtype)

    sum_acc[...] += jnp.sum(x_ref[...], axis=-1)              # zero padding is harmless
    if hw_pad > hw:
        col = j * hwt + lax.broadcasted_iota(jnp.int32, x_ref.shape, 2)
        xm = jnp.where(col < hw, x_ref[...], -jnp.inf)
    else:
        xm = x_ref[...]
    max_acc[...] = jnp.maximum(max_acc[...], jnp.max(xm, axis=-1))

    @pl.when(j == pl.num_programs(1) - 1)
    def _():
        att_ref[0] = _mlp_attention(sum_acc[...] * (1.0 / hw), max_acc[...],
                                    w1t_ref[...], w2t_ref[...])


def _ca_apply_kernel(att_ref, x_ref, o_ref):
    """Pass 2 (large maps): y = x * att, lane-dense stores."""
    att = att_ref[0]                                          # (bt, C)
    o_ref[...] = (x_ref[...] * att[:, :, None]).astype(o_ref.dtype)


def ca_block(x, w1, w2, *, block_budget_bytes=_BLOCK_BUDGET_BYTES):
    """x: (B, C, H, W) f32; w1: (C//ratio, C); w2: (C, C//ratio)."""
    B, C, H, W = x.shape
    HW = H * W
    Cr = w1.shape[0]
    itemsize = 4                                              # f32

    w1t = jnp.transpose(w1)                                   # (C, Cr)
    w2t = jnp.transpose(w2)                                   # (Cr, C)

    hw_pad = _round_up(HW, _LANE)                             # lane-dense output

    def pick_bt(per_elem_bytes):
        bt = max(1, block_budget_bytes // per_elem_bytes)
        bt = min(B, bt, max(_MAX_BT, pl.cdiv(B, _MIN_STEPS)))
        return pl.cdiv(B, pl.cdiv(B, bt))                     # rebalance, minimize pad

    single_pass = C * hw_pad * itemsize <= block_budget_bytes
    if single_pass:
        hwt, nhw = hw_pad, 1
    else:
        hwt = max(_LANE, (block_budget_bytes // (C * itemsize)) // _LANE * _LANE)
        nhw = pl.cdiv(hw_pad, hwt)
        hwt = _round_up(pl.cdiv(hw_pad, nhw), _LANE)          # rebalance HW tiles
        hw_pad = nhw * hwt

    bt = pick_bt(C * hwt * itemsize)
    nb = pl.cdiv(B, bt)
    b_pad = nb * bt

    xf = x.reshape(B, C, HW)
    if b_pad > B or hw_pad > HW:
        xf = jnp.pad(xf, ((0, b_pad - B), (0, 0), (0, hw_pad - HW)))

    def cparams(sem):
        return pltpu.CompilerParams(dimension_semantics=sem,
                                    vmem_limit_bytes=_VMEM_LIMIT_BYTES)

    if single_pass:
        out = pl.pallas_call(
            functools.partial(_ca_fused_kernel, hw=HW, hw_pad=hw_pad),
            out_shape=jax.ShapeDtypeStruct((b_pad, C, hw_pad), x.dtype),
            grid_spec=pltpu.PrefetchScalarGridSpec(
                num_scalar_prefetch=0,
                grid=(nb,),
                in_specs=[
                    pl.BlockSpec((bt, C, hw_pad), lambda b: (b, 0, 0)),
                    pl.BlockSpec((C, Cr), lambda b: (0, 0)),
                    pl.BlockSpec((Cr, C), lambda b: (0, 0)),
                ],
                out_specs=pl.BlockSpec((bt, C, hw_pad), lambda b: (b, 0, 0)),
            ),
            compiler_params=cparams(("parallel",)),
        )(xf, w1t, w2t)
    else:
        att = pl.pallas_call(
            functools.partial(_ca_pool_kernel, hw=HW, hwt=hwt, hw_pad=hw_pad),
            out_shape=jax.ShapeDtypeStruct((nb, bt, C), jnp.float32),
            grid_spec=pltpu.PrefetchScalarGridSpec(
                num_scalar_prefetch=0,
                grid=(nb, nhw),
                in_specs=[
                    pl.BlockSpec((bt, C, hwt), lambda b, j: (b, 0, j)),
                    pl.BlockSpec((C, Cr), lambda b, j: (0, 0)),
                    pl.BlockSpec((Cr, C), lambda b, j: (0, 0)),
                ],
                out_specs=pl.BlockSpec((1, bt, C), lambda b, j: (b, 0, 0)),
                scratch_shapes=[pltpu.VMEM((bt, C), jnp.float32),
                                pltpu.VMEM((bt, C), jnp.float32)],
            ),
            compiler_params=cparams(("parallel", "arbitrary")),
        )(xf, w1t, w2t)

        out = pl.pallas_call(
            _ca_apply_kernel,
            out_shape=jax.ShapeDtypeStruct((b_pad, C, hw_pad), x.dtype),
            grid_spec=pltpu.PrefetchScalarGridSpec(
                num_scalar_prefetch=0,
                grid=(nb, nhw),
                in_specs=[
                    pl.BlockSpec((1, bt, C), lambda b, j: (b, 0, 0)),
                    pl.BlockSpec((bt, C, hwt), lambda b, j: (b, 0, j)),
                ],
                out_specs=pl.BlockSpec((bt, C, hwt), lambda b, j: (b, 0, j)),
            ),
            compiler_params=cparams(("parallel", "parallel")),
        )(att, xf)

    return out[:B, :, :HW].reshape(B, C, H, W)


def ca_block_reference(x, w1, w2):
    # Pure-JAX reference mirroring the PyTorch forward.
    avg = jnp.mean(x, axis=(2, 3), keepdims=True)             # (B, C, 1, 1)
    mx = jnp.max(x, axis=(2, 3), keepdims=True)               # (B, C, 1, 1)

    def mlp(v):
        h = jnp.einsum("rc,bcxy->brxy", w1, v)
        h = jnp.maximum(h, 0.0)
        return jnp.einsum("cr,brxy->bcxy", w2, h)

    att = jax.nn.sigmoid(mlp(avg) + mlp(mx))
    return x * att


def _make_inputs(key, B, C, H, W, ratio=8):
    k_x, k_w1, k_w2 = jax.random.split(key, 3)
    Cr = max(1, C // ratio)
    x = jax.random.normal(k_x, (B, C, H, W), dtype=jnp.float32)
    # Conv2d(1x1, bias=False) default init: uniform(-1/sqrt(fan_in), 1/sqrt(fan_in))
    b1 = 1.0 / (C ** 0.5)
    b2 = 1.0 / (Cr ** 0.5)
    w1 = jax.random.uniform(k_w1, (Cr, C), jnp.float32, minval=-b1, maxval=b1)
    w2 = jax.random.uniform(k_w2, (C, Cr), jnp.float32, minval=-b2, maxval=b2)
    return x, w1, w2


if __name__ == "__main__":
    key = jax.random.PRNGKey(0)
    k1, k2, k3 = jax.random.split(key, 3)

    # 1) Main case (fused single-pass path): B=2, C=32, 16x16.
    x, w1, w2 = _make_inputs(k1, 2, 32, 16, 16)
    out = jax.block_until_ready(ca_block(x, w1, w2))
    ref = ca_block_reference(x, w1, w2)
    assert out.shape == x.shape
    assert jnp.allclose(out, ref, atol=1e-5, rtol=1e-5), "fused path mismatch"

    # 2) Fused path with non-128-aligned spatial size (lane padding + masked max).
    x, w1, w2 = _make_inputs(k2, 3, 24, 5, 5)
    out = jax.block_until_ready(ca_block(x, w1, w2))
    ref = ca_block_reference(x, w1, w2)
    assert jnp.allclose(out, ref, atol=1e-5, rtol=1e-5), "padded fused path mismatch"

    # 3) Two-pass tiled path (tiny forced block budget emulates a large UNet stage).
    x, w1, w2 = _make_inputs(k3, 2, 16, 15, 15)
    out = jax.block_until_ready(ca_block(x, w1, w2, block_budget_bytes=8 * 1024))
    ref = ca_block_reference(x, w1, w2)
    assert jnp.allclose(out, ref, atol=1e-5, rtol=1e-5), "tiled two-pass mismatch"

    print("KERNEL_OK")
</pallas_src>

<mosaic_0001>
module attributes {stable_mosaic.version = 11 : i64} {
  func.func @_ca_fused_kernel(%arg0: i32, %arg1: memref<2x32x256xf32, #tpu.memory_space<vmem>>, %arg2: memref<32x4xf32, #tpu.memory_space<vmem>>, %arg3: memref<4x32xf32, #tpu.memory_space<vmem>>, %arg4: memref<2x32x256xf32, #tpu.memory_space<vmem>>) attributes {dimension_semantics = [#tpu.dimension_semantics<parallel>], iteration_bounds = array<i64: 1>, scalar_prefetch = 0 : i64, scratch_operands = 0 : i64, tpu.core_type = #tpu.core_type<tc>, window_params = [{transform_indices = @transform_0, window_bounds = array<i64: 2, 32, 256>}, {pipeline_mode = #tpu.pipeline_mode<synchronous>, transform_indices = @transform_1, window_bounds = array<i64: 32, 4>}, {pipeline_mode = #tpu.pipeline_mode<synchronous>, transform_indices = @transform_2, window_bounds = array<i64: 4, 32>}, {transform_indices = @transform_3, window_bounds = array<i64: 2, 32, 256>}]} {
    %c0 = arith.constant 0 : index
    %c0_0 = arith.constant 0 : index
    %c0_1 = arith.constant 0 : index
    %0 = vector.load %arg1[%c0, %c0_0, %c0_1] : memref<2x32x256xf32, #tpu.memory_space<vmem>>, vector<2x32x256xf32>
    %cst = arith.constant dense<0.000000e+00> : vector<2x32xf32>
    %1 = vector.multi_reduction <add>, %0, %cst [2] : vector<2x32x256xf32> to vector<2x32xf32>
    %c0_2 = arith.constant 0 : index
    %c0_3 = arith.constant 0 : index
    %c0_4 = arith.constant 0 : index
    %2 = vector.load %arg1[%c0_2, %c0_3, %c0_4] : memref<2x32x256xf32, #tpu.memory_space<vmem>>, vector<2x32x256xf32>
    %cst_5 = arith.constant dense<0xFF800000> : vector<2x32xf32>
    %3 = vector.multi_reduction <maximumf>, %2, %cst_5 [2] : vector<2x32x256xf32> to vector<2x32xf32>
    %cst_6 = arith.constant 3.906250e-03 : f32
    %4 = vector.broadcast %cst_6 : f32 to vector<2x32xf32>
    %5 = arith.mulf %1, %4 : vector<2x32xf32>
    %c0_7 = arith.constant 0 : index
    %c0_8 = arith.constant 0 : index
    %6 = vector.load %arg2[%c0_7, %c0_8] : memref<32x4xf32, #tpu.memory_space<vmem>>, vector<32x4xf32>
    %c0_9 = arith.constant 0 : index
    %c0_10 = arith.constant 0 : index
    %7 = vector.load %arg3[%c0_9, %c0_10] : memref<4x32xf32, #tpu.memory_space<vmem>>, vector<4x32xf32>
    %cst_11 = arith.constant dense<0.000000e+00> : vector<2x4xf32>
    %8 = tpu.matmul %5, %6, %cst_11 {dimension_numbers = #tpu.dot_dimension_numbers<[1], [0], [0], [1], [0, 0, 1, 1], [], []>} : vector<2x32xf32>, vector<32x4xf32>, vector<2x4xf32> -> vector<2x4xf32>
    %cst_12 = arith.constant 0.000000e+00 : f32
    %9 = vector.broadcast %cst_12 : f32 to vector<2x4xf32>
    %10 = arith.maximumf %8, %9 : vector<2x4xf32>
    %cst_13 = arith.constant dense<0.000000e+00> : vector<2x4xf32>
    %11 = tpu.matmul %3, %6, %cst_13 {dimension_numbers = #tpu.dot_dimension_numbers<[1], [0], [0], [1], [0, 0, 1, 1], [], []>} : vector<2x32xf32>, vector<32x4xf32>, vector<2x4xf32> -> vector<2x4xf32>
    %cst_14 = arith.constant 0.000000e+00 : f32
    %12 = vector.broadcast %cst_14 : f32 to vector<2x4xf32>
    %13 = arith.maximumf %11, %12 : vector<2x4xf32>
    %14 = arith.addf %10, %13 : vector<2x4xf32>
    %cst_15 = arith.constant dense<0.000000e+00> : vector<2x32xf32>
    %15 = tpu.matmul %14, %7, %cst_15 {dimension_numbers = #tpu.dot_dimension_numbers<[1], [0], [0], [1], [0, 0, 1, 1], [], []>} : vector<2x4xf32>, vector<4x32xf32>, vector<2x32xf32> -> vector<2x32xf32>
    %16 = arith.negf %15 : vector<2x32xf32>
    %17 = math.exp %16 : vector<2x32xf32>
    %cst_16 = arith.constant 1.000000e+00 : f32
    %18 = vector.broadcast %cst_16 : f32 to vector<2x32xf32>
    %19 = arith.addf %18, %17 : vector<2x32xf32>
    %20 = arith.divf %18, %19 : vector<2x32xf32>
    %c0_17 = arith.constant 0 : index
    %c0_18 = arith.constant 0 : index
    %c0_19 = arith.constant 0 : index
    %21 = vector.load %arg1[%c0_17, %c0_18, %c0_19] : memref<2x32x256xf32, #tpu.memory_space<vmem>>, vector<2x32x256xf32>
    %22 = vector.shape_cast %20 : vector<2x32xf32> to vector<2x32x1xf32>
    %23 = vector.broadcast %22 : vector<2x32x1xf32> to vector<2x32x256xf32>
    %24 = arith.mulf %21, %23 : vector<2x32x256xf32>
    %c0_20 = arith.constant 0 : index
    %c0_21 = arith.constant 0 : index
    %c0_22 = arith.constant 0 : index
    %25 = vector.load %arg4[%c0_20, %c0_21, %c0_22] : memref<2x32x256xf32, #tpu.memory_space<vmem>>, vector<2x32x256xf32>
    tpu.vector_store %arg4[%c0_20, %c0_21, %c0_22], %24 {strides = array<i32>} : memref<2x32x256xf32, #tpu.memory_space<vmem>>, vector<2x32x256xf32>,
    return
  }
  func.func @transform_0(%arg0: i32) -> (i32, i32, i32) {
    %c0_i32 = arith.constant 0 : i32
    %c0_i32_0 = arith.constant 0 : i32
    %c0_i32_1 = arith.constant 0 : i32
    return %arg0, %c0_i32, %c0_i32_0 : i32, i32, i32
  }
  func.func @transform_1(%arg0: i32) -> (i32, i32) {
    %c0_i32 = arith.constant 0 : i32
    %c0_i32_0 = arith.constant 0 : i32
    %c0_i32_1 = arith.constant 0 : i32
    return %c0_i32, %c0_i32_0 : i32, i32
  }
  func.func @transform_2(%arg0: i32) -> (i32, i32) {
    %c0_i32 = arith.constant 0 : i32
    %c0_i32_0 = arith.constant 0 : i32
    %c0_i32_1 = arith.constant 0 : i32
    return %c0_i32, %c0_i32_0 : i32, i32
  }
  func.func @transform_3(%arg0: i32) -> (i32, i32, i32) {
    %c0_i32 = arith.constant 0 : i32
    %c0_i32_0 = arith.constant 0 : i32
    %c0_i32_1 = arith.constant 0 : i32
    return %arg0, %c0_i32, %c0_i32_0 : i32, i32, i32
  }
}

</mosaic_0001>

<llo_original>
// kernel: tpu_custom_call.1
$region0: #{tpu_custom_call.1}
  #allocation0 [shape = 'u32[]', space=smem, size = 0x4, offset = 0x4, fixed_abs, tag = 'smem constant byte address 0x4 - core index']
  #allocation1 [shape = 'u32[144,128]{1,0:T(1,128)}', space=vmem, size = 0x12000, scoped, tag = 'internal scratch']
  %s0 = inlined_call_operand.hbm [shape: f32[2,32,256], index: 0, kind: input, shape index: {}]
  %s1 = inlined_call_operand.vmem [shape: f32[32,4], index: 1, kind: input, shape index: {}]
  %s2 = inlined_call_operand.vmem [shape: f32[4,32], index: 2, kind: input, shape index: {}]
  %s3 = inlined_call_operand.hbm [shape: f32[2,32,256], index: 3, kind: output, shape index: {}]
  %s4 = sld [smem:[#allocation0]]
  $region26: #{tpu_custom_call.1} parent=0
    _
  %s6 = ssub.s32 1, %s4
  %s7 = scalar_select 0, %s6, %s4
  $region1: #{tpu_custom_call.1} parent=0
    #allocation2 [shape = 'u8[65536]{0}', space=vmem, size = 0x10000, scoped, tag = 'input window, operand 0, single buffered']
    #allocation3 [shape = 's32[1]{0}', space=sflag, size = 0x4, scoped, tag = 'scoped memory for tpu_custom_call.1']
    #allocation4 [shape = 's32[1]{0}', space=sflag, size = 0x4, scoped, tag = 'scoped memory for tpu_custom_call.1']
    #allocation5 [shape = 'u8[65536]{0}', space=vmem, size = 0x10000, scoped, tag = 'output window, operand 0, single buffered']
    %8 = vsyncpa [#allocation3], 0
    %9 = vsyncpa [#allocation4], 0
    // Predicated region
    $region2: #{tpu_custom_call.1} parent=1 // pred_check
      _
    $region3: #{tpu_custom_call.1} parent=1 // pred_check_branch
      %11 = sbr.rel (0) target = $region5
    $region4: #{tpu_custom_call.1} parent=1 // pred_region
      %s13 = ssub.s32 2048, 2048
      %14 = vsyncadd [#allocation3], %s13
      %s15 = sshll.u32 [#allocation2], 4
      %s16 = int_to_ptr.vmem [resolvable:$true] %s15
      %21 = dma.hbm_to_vmem [thread:$0]  %s0, 2048, %s16, [#allocation3], 256, 256, 16
    $region5: #{tpu_custom_call.1} parent=1 // pred_fallthru
      _
    // Predicated region
    $region6: #{tpu_custom_call.1} parent=1 // pred_check
      _
    $region7: #{tpu_custom_call.1} parent=1 // pred_check_branch
      %23 = sbr.rel (0) target = $region9
    $region8: #{tpu_custom_call.1} parent=1 // pred_region
      _
    $region9: #{tpu_custom_call.1} parent=1 // pred_fallthru
      _
    // Predicated region
    $region10: #{tpu_custom_call.1} parent=1 // pred_check
      _
    $region11: #{tpu_custom_call.1} parent=1 // pred_check_branch
      %25 = sbr.rel (0) target = $region13
    $region12: #{tpu_custom_call.1} parent=1 // pred_region
      _
    $region13: #{tpu_custom_call.1} parent=1 // pred_fallthru
      _
    // Predicated region
    $region14: #{tpu_custom_call.1} parent=1 // pred_check
      _
    $region15: #{tpu_custom_call.1} parent=1 // pred_check_branch
      %27 = sbr.rel (0) target = $region17
    $region16: #{tpu_custom_call.1} parent=1 // pred_region
      %28 = dma.done [#allocation3], 2048
    $region17: #{tpu_custom_call.1} parent=1 // pred_fallthru
      _
    %v29 = vld [vmem:[#allocation2] sm:$0xff]
    %v30 = vld [vmem:[#allocation2 + $0x8] sm:$0xff]
    %v31 = vld [vmem:[#allocation2 + $0x10] sm:$0xff]
    %v32 = vld [vmem:[#allocation2 + $0x18] sm:$0xff]
    %v33 = vld [vmem:[#allocation2 + $0x20] sm:$0xff]
    %v34 = vld [vmem:[#allocation2 + $0x28] sm:$0xff]
    %v35 = vld [vmem:[#allocation2 + $0x30] sm:$0xff]
    %v36 = vld [vmem:[#allocation2 + $0x38] sm:$0xff]
    %v37 = vld [vmem:[#allocation2 + $0x40] sm:$0xff]
    %v38 = vld [vmem:[#allocation2 + $0x48] sm:$0xff]
    %v39 = vld [vmem:[#allocation2 + $0x50] sm:$0xff]
    %v40 = vld [vmem:[#allocation2 + $0x58] sm:$0xff]
    %v41 = vld [vmem:[#allocation2 + $0x60] sm:$0xff]
    %v42 = vld [vmem:[#allocation2 + $0x68] sm:$0xff]
    %v43 = vld [vmem:[#allocation2 + $0x70] sm:$0xff]
    %v44 = vld [vmem:[#allocation2 + $0x78] sm:$0xff]
    %v45 = vadd.f32 %v29, %v30
    %46 = vadd.xlane.f32.xlu0 %v45
    %v47 = vpop.xlane.xlu0 %46
    %v48 = vadd.f32 %v31, %v32
    %49 = vadd.xlane.f32.xlu0 %v48
    %v50 = vpop.xlane.xlu0 %49
    %v51 = vadd.f32 %v33, %v34
    %52 = vadd.xlane.f32.xlu0 %v51
    %v53 = vpop.xlane.xlu0 %52
    %v54 = vadd.f32 %v35, %v36
    %55 = vadd.xlane.f32.xlu0 %v54
    %v56 = vpop.xlane.xlu0 %55
    %v57 = vadd.f32 %v37, %v38
    %58 = vadd.xlane.f32.xlu0 %v57
    %v59 = vpop.xlane.xlu0 %58
    %v60 = vadd.f32 %v39, %v40
    %61 = vadd.xlane.f32.xlu0 %v60
    %v62 = vpop.xlane.xlu0 %61
    %v63 = vadd.f32 %v41, %v42
    %64 = vadd.xlane.f32.xlu0 %v63
    %v65 = vpop.xlane.xlu0 %64
    %v66 = vadd.f32 %v43, %v44
    %67 = vadd.xlane.f32.xlu0 %v66
    %v68 = vpop.xlane.xlu0 %67
    %v69 = vmax.f32 %v29, %v30
    %70 = vmax.xlane.f32.xlu0 %v69
    %v71 = vpop.xlane.xlu0 %70
    %v72 = vmax.f32 %v31, %v32
    %73 = vmax.xlane.f32.xlu0 %v72
    %v74 = vpop.xlane.xlu0 %73
    %v75 = vmax.f32 %v33, %v34
    %76 = vmax.xlane.f32.xlu0 %v75
    %v77 = vpop.xlane.xlu0 %76
    %v78 = vmax.f32 %v35, %v36
    %79 = vmax.xlane.f32.xlu0 %v78
    %v80 = vpop.xlane.xlu0 %79
    %v81 = vmax.f32 %v37, %v38
    %82 = vmax.xlane.f32.xlu0 %v81
    %v83 = vpop.xlane.xlu0 %82
    %v84 = vmax.f32 %v39, %v40
    %85 = vmax.xlane.f32.xlu0 %v84
    %v86 = vpop.xlane.xlu0 %85
    %v87 = vmax.f32 %v41, %v42
    %88 = vmax.xlane.f32.xlu0 %v87
    %v89 = vpop.xlane.xlu0 %88
    %v90 = vmax.f32 %v43, %v44
    %91 = vmax.xlane.f32.xlu0 %v90
    %v92 = vpop.xlane.xlu0 %91
    %v93 = vmul.f32 %v47, 0.00390625
    %v94 = vmul.f32 %v50, 0.00390625
    %v95 = vmul.f32 %v53, 0.00390625
    %v96 = vmul.f32 %v56, 0.00390625
    %v97 = vmul.f32 %v59, 0.00390625
    %v98 = vmul.f32 %v62, 0.00390625
    %v99 = vmul.f32 %v65, 0.00390625
    %v100 = vmul.f32 %v68, 0.00390625
    %v101 = vld [vmem:[%s1] sm:$0xff]
    %v102 = vld [vmem:[%s1 + $0x8] sm:$0xff]
    %v103 = vld [vmem:[%s1 + $0x10] sm:$0xff]
    %v104 = vld [vmem:[%s1 + $0x18] sm:$0xff]
    %v105 = vld [vmem:[%s2] sm:$0xf]
    %v114 = vlaneseq
    %v115 = vand.u32 %v114, 127
    %v116 = vlaneseq
    %v117 = vshrl.u32 %v116, 7
    %v118 = vsub.s32 %v115, %v117
    %v119 = vrot.slane %v93, %v118
    %v120 = vadd.s32 %v115, 4294967288
    %v121 = vlaneseq
    %v122 = vshrl.u32 %v121, 7
    %v123 = vsub.s32 %v120, %v122
    %v124 = vrot.slane %v94, %v123
    %vm125 = vcmask 130112
    %v126 = vsel %vm125, %v124, %v119
    %v127 = vadd.s32 %v115, 4294967280
    %v128 = vlaneseq
    %v129 = vshrl.u32 %v128, 7
    %v130 = vsub.s32 %v127, %v129
    %v131 = vrot.slane %v95, %v130
    %vm132 = vcmask 195712
    %v133 = vsel %vm132, %v131, %v126
    %v134 = vadd.s32 %v115, 4294967272
    %v135 = vlaneseq
    %v136 = vshrl.u32 %v135, 7
    %v137 = vsub.s32 %v134, %v136
    %v138 = vrot.slane %v96, %v137
    %vm139 = vcmask 261312
    %v140 = vsel %vm139, %v138, %v133
    %v141 = vlaneseq
    %v142 = vshrl.u32 %v141, 7
    %v143 = vsub.s32 %v115, %v142
    %v144 = vrot.slane %v97, %v143
    %v145 = vlaneseq
    %v146 = vshrl.u32 %v145, 7
    %v147 = vsub.s32 %v120, %v146
    %v148 = vrot.slane %v98, %v147
    %v149 = vsel %vm125, %v148, %v144
    %v150 = vlaneseq
    %v151 = vshrl.u32 %v150, 7
    %v152 = vsub.s32 %v127, %v151
    %v153 = vrot.slane %v99, %v152
    %v154 = vsel %vm132, %v153, %v149
    %v155 = vlaneseq
    %v156 = vshrl.u32 %v155, 7
    %v157 = vsub.s32 %v134, %v156
    %v158 = vrot.slane %v100, %v157
    %v159 = vsel %vm139, %v158, %v154
    %vm160 = vcmask 1041409
    %v161 = vsel %vm160, %v159, %v140
    %vm162 = vcmask 261120
    %v163 = vsel %vm162, %v161, 0
    %165 = vmatprep.subr.mxu0 0.0
    %166 = vmatpush1.msra.mxu0 %v101
    %167 = vmatprep.subr.mxu0 0.0
    %168 = vmatpush1.msra.mxu0 %v102
    %169 = vmatprep.subr.mxu0 0.0
    %170 = vmatpush1.msra.mxu0 %v103
    %171 = vmatprep.subr.mxu0 0.0
    %172 = vmatpush1.msra.mxu0 %v104
    %173 = vmatprep.subr.mxu0 0.0
    %174 = vmatpush1.msra.mxu0 0.0
    %175 = vmatprep.subr.mxu0 0.0
    %176 = vmatpush1.msra.mxu0 0.0
    %177 = vmatprep.subr.mxu0 0.0
    %178 = vmatpush1.msra.mxu0 0.0
    %179 = vmatprep.subr.mxu0 0.0
    %180 = vmatpush1.msra.mxu0 0.0
    %181 = vmatprep.subr.mxu0 0.0
    %182 = vmatpush1.msra.mxu0 0.0
    %183 = vmatprep.subr.mxu0 0.0
    %184 = vmatpush1.msra.mxu0 0.0
    %185 = vmatprep.subr.mxu0 0.0
    %186 = vmatpush1.msra.mxu0 0.0
    %187 = vmatprep.subr.mxu0 0.0
    %188 = vmatpush1.msra.mxu0 0.0
    %189 = vmatprep.subr.mxu0 0.0
    %190 = vmatpush1.msra.mxu0 0.0
    %191 = vmatprep.subr.mxu0 0.0
    %192 = vmatpush1.msra.mxu0 0.0
    %193 = vmatprep.subr.mxu0 0.0
    %194 = vmatpush1.msra.mxu0 0.0
    %195 = vmatprep.subr.mxu0 0.0
    %196 = vmatpush1.msra.mxu0 0.0
    %197 = vmatprep.subr.mxu0 0.0
    %198 = vmatpush1.msra.mxu0 0.0
    %199 = vmatprep.subr.mxu0 0.0
    %200 = vmatpush1.msra.mxu0 0.0
    %201 = vmatprep.subr.mxu0 0.0
    %202 = vmatpush1.msra.mxu0 0.0
    %203 = vmatprep.subr.mxu0 0.0
    %204 = vmatpush1.msra.mxu0 0.0
    %205 = vmatprep.subr.mxu0 0.0
    %206 = vmatpush1.msra.mxu0 0.0
    %207 = vmatprep.subr.mxu0 0.0
    %208 = vmatpush1.msra.mxu0 0.0
    %209 = vmatprep.subr.mxu0 0.0
    %210 = vmatpush1.msra.mxu0 0.0
    %211 = vmatprep.subr.mxu0 0.0
    %212 = vmatpush1.msra.mxu0 0.0
    %213 = vmatprep.subr.mxu0 0.0
    %214 = vmatpush1.msra.mxu0 0.0
    %215 = vmatprep.subr.mxu0 0.0
    %216 = vmatpush1.msra.mxu0 0.0
    %217 = vmatprep.subr.mxu0 0.0
    %218 = vmatpush1.msra.mxu0 0.0
    %219 = vmatprep.subr.mxu0 0.0
    %220 = vmatpush1.msra.mxu0 0.0
    %221 = vmatprep.subr.mxu0 0.0
    %222 = vmatpush1.msra.mxu0 0.0
    %223 = vmatprep.subr.mxu0 0.0
    %224 = vmatpush1.msra.mxu0 0.0
    %225 = vmatprep.subr.mxu0 0.0
    %226 = vmatpush1.msra.mxu0 0.0
    %227 = vmatprep.subr.mxu0 0.0
    %228 = vmatpush1.msra.mxu0 0.0
    %229 = vmatprep.mubr.f32.mxu0 0.0
    %230 = vmatmul.mubr.f32.gmra.mrb[0].mxu0 %v163
    %v231 = vpop.f32.mrb[0].mxu0
    %v232 = vadd.f32 0.0, %v231
    %v233 = vpop.f32.mrb[0].mxu0
    %234 = vdwg.mxu0
    %v235 = vmax.f32 %v232, 0.0
    %v244 = vlaneseq
    %v245 = vshrl.u32 %v244, 7
    %v246 = vsub.s32 %v115, %v245
    %v247 = vrot.slane %v71, %v246
    %v248 = vlaneseq
    %v249 = vshrl.u32 %v248, 7
    %v250 = vsub.s32 %v120, %v249
    %v251 = vrot.slane %v74, %v250
    %v252 = vsel %vm125, %v251, %v247
    %v253 = vlaneseq
    %v254 = vshrl.u32 %v253, 7
    %v255 = vsub.s32 %v127, %v254
    %v256 = vrot.slane %v77, %v255
    %v257 = vsel %vm132, %v256, %v252
    %v258 = vlaneseq
    %v259 = vshrl.u32 %v258, 7
    %v260 = vsub.s32 %v134, %v259
    %v261 = vrot.slane %v80, %v260
    %v262 = vsel %vm139, %v261, %v257
    %v263 = vlaneseq
    %v264 = vshrl.u32 %v263, 7
    %v265 = vsub.s32 %v115, %v264
    %v266 = vrot.slane %v83, %v265
    %v267 = vlaneseq
    %v268 = vshrl.u32 %v267, 7
    %v269 = vsub.s32 %v120, %v268
    %v270 = vrot.slane %v86, %v269
    %v271 = vsel %vm125, %v270, %v266
    %v272 = vlaneseq
    %v273 = vshrl.u32 %v272, 7
    %v274 = vsub.s32 %v127, %v273
    %v275 = vrot.slane %v89, %v274
    %v276 = vsel %vm132, %v275, %v271
    %v277 = vlaneseq
    %v278 = vshrl.u32 %v277, 7
    %v279 = vsub.s32 %v134, %v278
    %v280 = vrot.slane %v92, %v279
    %v281 = vsel %vm139, %v280, %v276
    %v282 = vsel %vm160, %v281, %v262
    %v283 = vsel %vm162, %v282, 0
    %285 = vmatprep.subr.mxu0 0.0
    %286 = vmatpush1.msra.mxu0 %v101
    %287 = vmatprep.subr.mxu0 0.0
    %288 = vmatpush1.msra.mxu0 %v102
    %289 = vmatprep.subr.mxu0 0.0
    %290 = vmatpush1.msra.mxu0 %v103
    %291 = vmatprep.subr.mxu0 0.0
    %292 = vmatpush1.msra.mxu0 %v104
    %293 = vmatprep.subr.mxu0 0.0
    %294 = vmatpush1.msra.mxu0 0.0
    %295 = vmatprep.subr.mxu0 0.0
    %296 = vmatpush1.msra.mxu0 0.0
    %297 = vmatprep.subr.mxu0 0.0
    %298 = vmatpush1.msra.mxu0 0.0
    %299 = vmatprep.subr.mxu0 0.0
    %300 = vmatpush1.msra.mxu0 0.0
    %301 = vmatprep.subr.mxu0 0.0
    %302 = vmatpush1.msra.mxu0 0.0
    %303 = vmatprep.subr.mxu0 0.0
    %304 = vmatpush1.msra.mxu0 0.0
    %305 = vmatprep.subr.mxu0 0.0
    %306 = vmatpush1.msra.mxu0 0.0
    %307 = vmatprep.subr.mxu0 0.0
    %308 = vmatpush1.msra.mxu0 0.0
    %309 = vmatprep.subr.mxu0 0.0
    %310 = vmatpush1.msra.mxu0 0.0
    %311 = vmatprep.subr.mxu0 0.0
    %312 = vmatpush1.msra.mxu0 0.0
    %313 = vmatprep.subr.mxu0 0.0
    %314 = vmatpush1.msra.mxu0 0.0
    %315 = vmatprep.subr.mxu0 0.0
    %316 = vmatpush1.msra.mxu0 0.0
    %317 = vmatprep.subr.mxu0 0.0
    %318 = vmatpush1.msra.mxu0 0.0
    %319 = vmatprep.subr.mxu0 0.0
    %320 = vmatpush1.msra.mxu0 0.0
    %321 = vmatprep.subr.mxu0 0.0
    %322 = vmatpush1.msra.mxu0 0.0
    %323 = vmatprep.subr.mxu0 0.0
    %324 = vmatpush1.msra.mxu0 0.0
    %325 = vmatprep.subr.mxu0 0.0
    %326 = vmatpush1.msra.mxu0 0.0
    %327 = vmatprep.subr.mxu0 0.0
    %328 = vmatpush1.msra.mxu0 0.0
    %329 = vmatprep.subr.mxu0 0.0
    %330 = vmatpush1.msra.mxu0 0.0
    %331 = vmatprep.subr.mxu0 0.0
    %332 = vmatpush1.msra.mxu0 0.0
    %333 = vmatprep.subr.mxu0 0.0
    %334 = vmatpush1.msra.mxu0 0.0
    %335 = vmatprep.subr.mxu0 0.0
    %336 = vmatpush1.msra.mxu0 0.0
    %337 = vmatprep.subr.mxu0 0.0
    %338 = vmatpush1.msra.mxu0 0.0
    %339 = vmatprep.subr.mxu0 0.0
    %340 = vmatpush1.msra.mxu0 0.0
    %341 = vmatprep.subr.mxu0 0.0
    %342 = vmatpush1.msra.mxu0 0.0
    %343 = vmatprep.subr.mxu0 0.0
    %344 = vmatpush1.msra.mxu0 0.0
    %345 = vmatprep.subr.mxu0 0.0
    %346 = vmatpush1.msra.mxu0 0.0
    %347 = vmatprep.subr.mxu0 0.0
    %348 = vmatpush1.msra.mxu0 0.0
    %349 = vmatprep.mubr.f32.mxu0 0.0
    %350 = vmatmul.mubr.f32.gmra.mrb[0].mxu0 %v283
    %v351 = vpop.f32.mrb[0].mxu0
    %v352 = vadd.f32 0.0, %v351
    %v353 = vpop.f32.mrb[0].mxu0
    %354 = vdwg.mxu0
    %v355 = vmax.f32 %v352, 0.0
    %v356 = vadd.f32 %v235, %v355
    %vm357 = vcmask 31744
    %v359 = vsel %vm357, %v356, 0
    %vm361 = vcmask 1043456
    %v363 = vsel %vm361, %v105, 0
    %365 = vmatprep.subr.mxu0 0.0
    %366 = vmatpush1.msra.mxu0 %v363
    %367 = vmatprep.subr.mxu0 0.0
    %368 = vmatpush1.msra.mxu0 0.0
    %369 = vmatprep.subr.mxu0 0.0
    %370 = vmatpush1.msra.mxu0 0.0
    %371 = vmatprep.subr.mxu0 0.0
    %372 = vmatpush1.msra.mxu0 0.0
    %373 = vmatprep.subr.mxu0 0.0
    %374 = vmatpush1.msra.mxu0 0.0
    %375 = vmatprep.subr.mxu0 0.0
    %376 = vmatpush1.msra.mxu0 0.0
    %377 = vmatprep.subr.mxu0 0.0
    %378 = vmatpush1.msra.mxu0 0.0
    %379 = vmatprep.subr.mxu0 0.0
    %380 = vmatpush1.msra.mxu0 0.0
    %381 = vmatprep.subr.mxu0 0.0
    %382 = vmatpush1.msra.mxu0 0.0
    %383 = vmatprep.subr.mxu0 0.0
    %384 = vmatpush1.msra.mxu0 0.0
    %385 = vmatprep.subr.mxu0 0.0
    %386 = vmatpush1.msra.mxu0 0.0
    %387 = vmatprep.subr.mxu0 0.0
    %388 = vmatpush1.msra.mxu0 0.0
    %389 = vmatprep.subr.mxu0 0.0
    %390 = vmatpush1.msra.mxu0 0.0
    %391 = vmatprep.subr.mxu0 0.0
    %392 = vmatpush1.msra.mxu0 0.0
    %393 = vmatprep.subr.mxu0 0.0
    %394 = vmatpush1.msra.mxu0 0.0
    %395 = vmatprep.subr.mxu0 0.0
    %396 = vmatpush1.msra.mxu0 0.0
    %397 = vmatprep.subr.mxu0 0.0
    %398 = vmatpush1.msra.mxu0 0.0
    %399 = vmatprep.subr.mxu0 0.0
    %400 = vmatpush1.msra.mxu0 0.0
    %401 = vmatprep.subr.mxu0 0.0
    %402 = vmatpush1.msra.mxu0 0.0
    %403 = vmatprep.subr.mxu0 0.0
    %404 = vmatpush1.msra.mxu0 0.0
    %405 = vmatprep.subr.mxu0 0.0
    %406 = vmatpush1.msra.mxu0 0.0
    %407 = vmatprep.subr.mxu0 0.0
    %408 = vmatpush1.msra.mxu0 0.0
    %409 = vmatprep.subr.mxu0 0.0
    %410 = vmatpush1.msra.mxu0 0.0
    %411 = vmatprep.subr.mxu0 0.0
    %412 = vmatpush1.msra.mxu0 0.0
    %413 = vmatprep.subr.mxu0 0.0
    %414 = vmatpush1.msra.mxu0 0.0
    %415 = vmatprep.subr.mxu0 0.0
    %416 = vmatpush1.msra.mxu0 0.0
    %417 = vmatprep.subr.mxu0 0.0
    %418 = vmatpush1.msra.mxu0 0.0
    %419 = vmatprep.subr.mxu0 0.0
    %420 = vmatpush1.msra.mxu0 0.0
    %421 = vmatprep.subr.mxu0 0.0
    %422 = vmatpush1.msra.mxu0 0.0
    %423 = vmatprep.subr.mxu0 0.0
    %424 = vmatpush1.msra.mxu0 0.0
    %425 = vmatprep.subr.mxu0 0.0
    %426 = vmatpush1.msra.mxu0 0.0
    %427 = vmatprep.subr.mxu0 0.0
    %428 = vmatpush1.msra.mxu0 0.0
    %429 = vmatprep.mubr.f32.mxu0 0.0
    %430 = vmatmul.mubr.f32.gmra.mrb[0].mxu0 %v359
    %v431 = vpop.f32.mrb[0].mxu0
    %v432 = vadd.f32 0.0, %v431
    %v433 = vpop.f32.mrb[0].mxu0
    %434 = vdwg.mxu0
    %v435 = vxor.u32 %v432, 2147483648
    %v436 = vmul.f32 %v435, 1.442695
    %v437 = vpow.pop %v436
    %v438 = vadd.f32 %v437, 1.0
    %v439 = vrcp.pop %v438
    %v440 = vmul.f32 1.0, %v439
    %v441 = vlaneseq
    %v442 = vshrl.u32 %v441, 7
    %v443 = vsub.s32 0, %v442
    %v444 = vrot.slane %v440, %v443
    %446 = vbcast.lane.b32.xlu0 %v444, 256
    %v447 = vpop.permute.xlu0 %446
    %s449 = sor.u32 256, 8
    %450 = vbcast.lane.b32.xlu0 %v444, %s449
    %v451 = vpop.permute.xlu0 %450
    %s453 = sor.u32 256, 16
    %454 = vbcast.lane.b32.xlu0 %v444, %s453
    %v455 = vpop.permute.xlu0 %454
    %s457 = sor.u32 256, 24
    %458 = vbcast.lane.b32.xlu0 %v444, %s457
    %v459 = vpop.permute.xlu0 %458
    %v460 = vlaneseq
    %v461 = vshrl.u32 %v460, 7
    %v462 = vsub.s32 1, %v461
    %v463 = vrot.slane %v440, %v462
    %465 = vbcast.lane.b32.xlu0 %v463, 256
    %v466 = vpop.permute.xlu0 %465
    %s468 = sor.u32 256, 8
    %469 = vbcast.lane.b32.xlu0 %v463, %s468
    %v470 = vpop.permute.xlu0 %469
    %s472 = sor.u32 256, 16
    %473 = vbcast.lane.b32.xlu0 %v463, %s472
    %v474 = vpop.permute.xlu0 %473
    %s476 = sor.u32 256, 24
    %477 = vbcast.lane.b32.xlu0 %v463, %s476
    %v478 = vpop.permute.xlu0 %477
    %v479 = vmul.f32 %v29, %v447
    %v480 = vmul.f32 %v30, %v447
    %v481 = vmul.f32 %v31, %v451
    %v482 = vmul.f32 %v32, %v451
    %v483 = vmul.f32 %v33, %v455
    %v484 = vmul.f32 %v34, %v455
    %v485 = vmul.f32 %v35, %v459
    %v486 = vmul.f32 %v36, %v459
    %v487 = vmul.f32 %v37, %v466
    %v488 = vmul.f32 %v38, %v466
    %v489 = vmul.f32 %v39, %v470
    %v490 = vmul.f32 %v40, %v470
    %v491 = vmul.f32 %v41, %v474
    %v492 = vmul.f32 %v42, %v474
    %v493 = vmul.f32 %v43, %v478
    %v494 = vmul.f32 %v44, %v478
    %495 = vst [vmem:[#allocation5] sm:$0xff] %v479
    %496 = vst [vmem:[#allocation5 + $0x8] sm:$0xff] %v480
    %497 = vst [vmem:[#allocation5 + $0x10] sm:$0xff] %v481
    %498 = vst [vmem:[#allocation5 + $0x18] sm:$0xff] %v482
    %499 = vst [vmem:[#allocation5 + $0x20] sm:$0xff] %v483
    %500 = vst [vmem:[#allocation5 + $0x28] sm:$0xff] %v484
    %501 = vst [vmem:[#allocation5 + $0x30] sm:$0xff] %v485
    %502 = vst [vmem:[#allocation5 + $0x38] sm:$0xff] %v486
    %503 = vst [vmem:[#allocation5 + $0x40] sm:$0xff] %v487
    %504 = vst [vmem:[#allocation5 + $0x48] sm:$0xff] %v488
    %505 = vst [vmem:[#allocation5 + $0x50] sm:$0xff] %v489
    %506 = vst [vmem:[#allocation5 + $0x58] sm:$0xff] %v490
    %507 = vst [vmem:[#allocation5 + $0x60] sm:$0xff] %v491
    %508 = vst [vmem:[#allocation5 + $0x68] sm:$0xff] %v492
    %509 = vst [vmem:[#allocation5 + $0x70] sm:$0xff] %v493
    %510 = vst [vmem:[#allocation5 + $0x78] sm:$0xff] %v494
    // Predicated region
    $region18: #{tpu_custom_call.1} parent=1 // pred_check
      _
    $region19: #{tpu_custom_call.1} parent=1 // pred_check_branch
      %512 = sbr.rel (0) target = $region21
    $region20: #{tpu_custom_call.1} parent=1 // pred_region
      %s514 = ssub.s32 2048, 2048
      %515 = vsyncadd [#allocation4], %s514
      %s516 = sshll.u32 [#allocation5], 4
      %s517 = int_to_ptr.vmem [resolvable:$true] %s516
      %522 = dma.vmem_to_hbm [thread:$0]  %s517, 2048, %s3, [#allocation4], 256, 256, 16
    $region21: #{tpu_custom_call.1} parent=1 // pred_fallthru
      _
    // Predicated region
    $region22: #{tpu_custom_call.1} parent=1 // pred_check
      _
    $region23: #{tpu_custom_call.1} parent=1 // pred_check_branch
      %524 = sbr.rel (0) target = $region25
    $region24: #{tpu_custom_call.1} parent=1 // pred_region
      %525 = dma.done [#allocation4], 2048
    $region25: #{tpu_custom_call.1} parent=1 // pred_fallthru
      _
    %526 = vsyncpa [#allocation3], 1
    %527 = vsyncpa [#allocation4], 1

</llo_original>
